<compile_context>
chip_gen: v6e
topology: v6e:2x2x1
jax: 0.10.0
libtpu: 0.0.40
codegen_flags: <defaults>
</compile_context>

<pallas_src>
import jax
import jax.numpy as jnp
from jax.experimental import pallas as pl
from jax.experimental.pallas import tpu as pltpu

N_EMBD = 32
HIDDEN = 4 * N_EMBD          # 128
PACK = 128 // N_EMBD         # 4 token rows packed per 128-lane vector row
L = PACK * N_EMBD            # 128  (packed row width)
H4 = PACK * HIDDEN           # 512  (packed hidden width)
DROPOUT = 0.0                # Dropout(0) is identity (train & eval) -> no-op


def ffn_kernel(x_ref, w1_ref, b1_ref, w2_ref, b2_ref, o_ref):
    # x_ref : (tm4, 128) f32   -- 4 token rows of width 32 packed per lane-row
    # w1_ref: (128, 512) bf16  -- kron(I_4, W1) block-diagonal
    # b1_ref: (1, 512)   f32   -- tile(b1, 4)
    # w2_ref: (512, 128) bf16  -- kron(I_4, W2) block-diagonal
    # b2_ref: (1, 128)   f32   -- tile(b2, 4)
    # o_ref : (tm4, 128) f32
    x = x_ref[...].astype(jnp.bfloat16)                      # bf16 MXU inputs
    h = jnp.dot(x, w1_ref[...],
                preferred_element_type=jnp.float32) + b1_ref[...]
    h = jnp.maximum(h, 0.0)                                  # ReLU in f32
    y = jnp.dot(h.astype(jnp.bfloat16), w2_ref[...],
                preferred_element_type=jnp.float32) + b2_ref[...]
    o_ref[...] = y.astype(o_ref.dtype)                       # Dropout(p=0) == identity


def prepare_params(w1, b1, w2, b2, *, compute_dtype=jnp.bfloat16):
    """One-time weight packing (hoisted out of the call path).

    Weights are expanded block-diagonally so the lane-packed activations need no
    in-kernel reshape; they are cast to bf16 for the MXU. Biases stay f32.
    """
    eye = jnp.eye(PACK, dtype=jnp.float32)
    w1b = jnp.kron(eye, w1.astype(jnp.float32)).astype(compute_dtype)       # (128, 512)
    w2b = jnp.kron(eye, w2.astype(jnp.float32)).astype(compute_dtype)       # (512, 128)
    b1b = jnp.tile(b1.astype(jnp.float32), PACK).reshape(1, H4)             # (1, 512)
    b2b = jnp.tile(b2.astype(jnp.float32), PACK).reshape(1, L)              # (1, 128)
    return w1b, b1b, w2b, b2b


def _choose_tm4(m4: int) -> int:
    """Packed-row tile: target ~1 MiB f32 x/out tiles, keep several grid steps."""
    TARGET = 2048        # 2048 packed rows x 128 lanes x 4 B = 1 MiB per tile
    MIN_LARGE = 512      # don't shrink tiles below 512 packed rows just to add steps
    PREF_STEPS = 4
    if m4 < 16:
        return m4                                           # tiny input: one full block
    tm4 = min(TARGET, max(8, ((m4 // 2) // 8) * 8))         # >= 2 steps (v7x megacore)
    while tm4 >= 2 * MIN_LARGE and pl.cdiv(m4, tm4) < PREF_STEPS:
        tm4 //= 2                                           # prefer >= 4 steps if tiles stay big
    return max(tm4, 8)


def feed_forward(x, packed_params, *, tm4=None):
    """x: (B, T, n_embd) float32. packed_params = prepare_params(...). Returns (B, T, n_embd)."""
    w1b, b1b, w2b, b2b = packed_params
    B, T, E = x.shape
    assert E == N_EMBD
    M = B * T

    # ---- lane-dense packing: 4 consecutive token rows -> one 128-lane row (free view)
    x2 = x.reshape(M, E)
    M4 = pl.cdiv(M, PACK)
    if M4 * PACK != M:
        x2 = jnp.pad(x2, ((0, M4 * PACK - M), (0, 0)))      # <= 3 rows, ragged M only
    x4 = x2.reshape(M4, L)                                   # (M4, 128)

    # ---- row tiling over packed rows; partial boundary block handled by Pallas masking
    if tm4 is None:
        tm4 = _choose_tm4(M4)
    else:
        tm4 = M4 if M4 < 8 else min(M4, max(8, (tm4 // 8) * 8))
    grid = (pl.cdiv(M4, tm4),)

    out4 = pl.pallas_call(
        ffn_kernel,
        out_shape=jax.ShapeDtypeStruct((M4, L), x.dtype),
        grid_spec=pltpu.PrefetchScalarGridSpec(
            num_scalar_prefetch=0,
            grid=grid,
            in_specs=[
                pl.BlockSpec((tm4, L), lambda i: (i, 0)),    # x tile (pipelined)
                pl.BlockSpec((L, H4), lambda i: (0, 0)),     # kron(I_4, W1) bf16, resident
                pl.BlockSpec((1, H4), lambda i: (0, 0)),     # b1 f32, resident
                pl.BlockSpec((H4, L), lambda i: (0, 0)),     # kron(I_4, W2) bf16, resident
                pl.BlockSpec((1, L), lambda i: (0, 0)),      # b2 f32, resident
            ],
            out_specs=pl.BlockSpec((tm4, L), lambda i: (i, 0)),
        ),
        compiler_params=pltpu.CompilerParams(
            dimension_semantics=("parallel",),               # megacore-shardable on v7x
            vmem_limit_bytes=32 * 1024 * 1024,               # valid on v5e/v6e/v7x; ~12 MiB used
        ),
    )(x4, w1b, b1b, w2b, b2b)

    out = out4.reshape(M4 * PACK, E)
    if M4 * PACK != M:
        out = out[:M]
    return out.reshape(B, T, E)


def init_params(key):
    """Deterministic init mirroring nn.Linear default (uniform +/- 1/sqrt(fan_in))."""
    k1, k2, k3, k4 = jax.random.split(key, 4)
    bound1 = 1.0 / jnp.sqrt(N_EMBD)
    bound2 = 1.0 / jnp.sqrt(HIDDEN)
    # Stored (in_features, out_features): kernel computes x @ W (== PyTorch x @ W.T).
    w1 = jax.random.uniform(k1, (N_EMBD, HIDDEN), jnp.float32, -bound1, bound1)
    b1 = jax.random.uniform(k2, (HIDDEN,), jnp.float32, -bound1, bound1)
    w2 = jax.random.uniform(k3, (HIDDEN, N_EMBD), jnp.float32, -bound2, bound2)
    b2 = jax.random.uniform(k4, (N_EMBD,), jnp.float32, -bound2, bound2)
    return w1, b1, w2, b2


if __name__ == "__main__":
    key = jax.random.PRNGKey(0)
    kx, kp = jax.random.split(key)
    w1, b1, w2, b2 = init_params(kp)
    packed = prepare_params(w1, b1, w2, b2)

    def ref_ffn(xx):
        h = jnp.maximum(xx.reshape(-1, N_EMBD) @ w1 + b1, 0.0)
        return (h @ w2 + b2).reshape(xx.shape)

    def check(xx):
        out = jax.block_until_ready(feed_forward(xx, packed))
        assert out.shape == xx.shape and out.dtype == xx.dtype
        ref = ref_ffn(xx)
        # bf16 matmul inputs (f32 accumulation) vs. full-f32 reference -> loose tolerance.
        err = float(jnp.max(jnp.abs(out - ref)))
        assert jnp.allclose(out, ref, atol=5e-2, rtol=5e-2), f"max abs err {err}"

    # 1) required small shape (B=2, T=8): single full-array block (M4=4)
    check(jax.random.normal(kx, (2, 8, N_EMBD), jnp.float32))
    # 2) moderate shape: 4096 token rows -> 2 pipelined steps of 512 packed rows
    check(jax.random.normal(jax.random.PRNGKey(1), (4, 1024, N_EMBD), jnp.float32))
    # 3) ragged row count: PACK pad + partial boundary block masking (M4=73, tm4=32)
    check(jax.random.normal(jax.random.PRNGKey(2), (3, 97, N_EMBD), jnp.float32))
    # 4) large shape: exercises the ~1 MiB tiles (tm4=2048) and a 4-step pipeline
    check(jax.random.normal(jax.random.PRNGKey(3), (32, 1024, N_EMBD), jnp.float32))

    print("KERNEL_OK")
</pallas_src>

<mosaic_0001>
module attributes {stable_mosaic.version = 11 : i64} {
  func.func @ffn_kernel(%arg0: i32, %arg1: memref<4x128xf32, #tpu.memory_space<vmem>>, %arg2: memref<128x512xbf16, #tpu.memory_space<vmem>>, %arg3: memref<1x512xf32, #tpu.memory_space<vmem>>, %arg4: memref<512x128xbf16, #tpu.memory_space<vmem>>, %arg5: memref<1x128xf32, #tpu.memory_space<vmem>>, %arg6: memref<4x128xf32, #tpu.memory_space<vmem>>) attributes {dimension_semantics = [#tpu.dimension_semantics<parallel>], iteration_bounds = array<i64: 1>, scalar_prefetch = 0 : i64, scratch_operands = 0 : i64, tpu.core_type = #tpu.core_type<tc>, window_params = [{transform_indices = @transform_0, window_bounds = array<i64: 4, 128>}, {pipeline_mode = #tpu.pipeline_mode<synchronous>, transform_indices = @transform_1, window_bounds = array<i64: 128, 512>}, {pipeline_mode = #tpu.pipeline_mode<synchronous>, transform_indices = @transform_2, window_bounds = array<i64: 1, 512>}, {pipeline_mode = #tpu.pipeline_mode<synchronous>, transform_indices = @transform_3, window_bounds = array<i64: 512, 128>}, {pipeline_mode = #tpu.pipeline_mode<synchronous>, transform_indices = @transform_4, window_bounds = array<i64: 1, 128>}, {transform_indices = @transform_5, window_bounds = array<i64: 4, 128>}]} {
    %c0 = arith.constant 0 : index
    %c0_0 = arith.constant 0 : index
    %0 = vector.load %arg1[%c0, %c0_0] : memref<4x128xf32, #tpu.memory_space<vmem>>, vector<4x128xf32>
    %1 = arith.truncf %0 : vector<4x128xf32> to vector<4x128xbf16>
    %c0_1 = arith.constant 0 : index
    %c0_2 = arith.constant 0 : index
    %2 = vector.load %arg2[%c0_1, %c0_2] : memref<128x512xbf16, #tpu.memory_space<vmem>>, vector<128x512xbf16>
    %cst = arith.constant dense<0.000000e+00> : vector<4x512xf32>
    %3 = tpu.matmul %1, %2, %cst {dimension_numbers = #tpu.dot_dimension_numbers<[1], [0], [0], [1], [0, 0, 1, 1], [], []>} : vector<4x128xbf16>, vector<128x512xbf16>, vector<4x512xf32> -> vector<4x512xf32>
    %c0_3 = arith.constant 0 : index
    %c0_4 = arith.constant 0 : index
    %4 = vector.load %arg3[%c0_3, %c0_4] : memref<1x512xf32, #tpu.memory_space<vmem>>, vector<1x512xf32>
    %5 = vector.broadcast %4 : vector<1x512xf32> to vector<4x512xf32>
    %6 = arith.addf %3, %5 : vector<4x512xf32>
    %cst_5 = arith.constant 0.000000e+00 : f32
    %7 = vector.broadcast %cst_5 : f32 to vector<4x512xf32>
    %8 = arith.maximumf %6, %7 : vector<4x512xf32>
    %9 = arith.truncf %8 : vector<4x512xf32> to vector<4x512xbf16>
    %c0_6 = arith.constant 0 : index
    %c0_7 = arith.constant 0 : index
    %10 = vector.load %arg4[%c0_6, %c0_7] : memref<512x128xbf16, #tpu.memory_space<vmem>>, vector<512x128xbf16>
    %cst_8 = arith.constant dense<0.000000e+00> : vector<4x128xf32>
    %11 = tpu.matmul %9, %10, %cst_8 {dimension_numbers = #tpu.dot_dimension_numbers<[1], [0], [0], [1], [0, 0, 1, 1], [], []>} : vector<4x512xbf16>, vector<512x128xbf16>, vector<4x128xf32> -> vector<4x128xf32>
    %c0_9 = arith.constant 0 : index
    %c0_10 = arith.constant 0 : index
    %12 = vector.load %arg5[%c0_9, %c0_10] : memref<1x128xf32, #tpu.memory_space<vmem>>, vector<1x128xf32>
    %13 = vector.broadcast %12 : vector<1x128xf32> to vector<4x128xf32>
    %14 = arith.addf %11, %13 : vector<4x128xf32>
    %c0_11 = arith.constant 0 : index
    %c0_12 = arith.constant 0 : index
    %15 = vector.load %arg6[%c0_11, %c0_12] : memref<4x128xf32, #tpu.memory_space<vmem>>, vector<4x128xf32>
    tpu.vector_store %arg6[%c0_11, %c0_12], %14 {strides = array<i32>} : memref<4x128xf32, #tpu.memory_space<vmem>>, vector<4x128xf32>,
    return
  }
  func.func @transform_0(%arg0: i32) -> (i32, i32) {
    %c0_i32 = arith.constant 0 : i32
    %c0_i32_0 = arith.constant 0 : i32
    return %arg0, %c0_i32 : i32, i32
  }
  func.func @transform_1(%arg0: i32) -> (i32, i32) {
    %c0_i32 = arith.constant 0 : i32
    %c0_i32_0 = arith.constant 0 : i32
    %c0_i32_1 = arith.constant 0 : i32
    return %c0_i32, %c0_i32_0 : i32, i32
  }
  func.func @transform_2(%arg0: i32) -> (i32, i32) {
    %c0_i32 = arith.constant 0 : i32
    %c0_i32_0 = arith.constant 0 : i32
    %c0_i32_1 = arith.constant 0 : i32
    return %c0_i32, %c0_i32_0 : i32, i32
  }
  func.func @transform_3(%arg0: i32) -> (i32, i32) {
    %c0_i32 = arith.constant 0 : i32
    %c0_i32_0 = arith.constant 0 : i32
    %c0_i32_1 = arith.constant 0 : i32
    return %c0_i32, %c0_i32_0 : i32, i32
  }
  func.func @transform_4(%arg0: i32) -> (i32, i32) {
    %c0_i32 = arith.constant 0 : i32
    %c0_i32_0 = arith.constant 0 : i32
    %c0_i32_1 = arith.constant 0 : i32
    return %c0_i32, %c0_i32_0 : i32, i32
  }
  func.func @transform_5(%arg0: i32) -> (i32, i32) {
    %c0_i32 = arith.constant 0 : i32
    %c0_i32_0 = arith.constant 0 : i32
    return %arg0, %c0_i32 : i32, i32
  }
}

</mosaic_0001>

<llo_original>
// kernel: tpu_custom_call.1
$region0: #{tpu_custom_call.1}
  #allocation0 [shape = 'u32[]', space=smem, size = 0x4, offset = 0x4, fixed_abs, tag = 'smem constant byte address 0x4 - core index']
  #allocation1 [shape = 'u32[144,128]{1,0:T(1,128)}', space=vmem, size = 0x12000, scoped, tag = 'internal scratch']
  %s0 = inlined_call_operand.hbm [shape: f32[4,128], index: 0, kind: input, shape index: {}]
  %s1 = inlined_call_operand.hbm [shape: bf16[128,512], index: 1, kind: input, shape index: {}]
  %s2 = inlined_call_operand.hbm [shape: f32[1,512], index: 2, kind: input, shape index: {}]
  %s3 = inlined_call_operand.hbm [shape: bf16[512,128], index: 3, kind: input, shape index: {}]
  %s4 = inlined_call_operand.vmem [shape: f32[1,128], index: 4, kind: input, shape index: {}]
  %s5 = inlined_call_operand.hbm [shape: f32[4,128], index: 5, kind: output, shape index: {}]
  %s6 = sld [smem:[#allocation0]]
  $region46: #{tpu_custom_call.1} parent=0
    _
  %s8 = ssub.s32 1, %s6
  %s9 = scalar_select 0, %s8, %s6
  $region1: #{tpu_custom_call.1} parent=0
    #allocation2 [shape = 'u8[2048]{0}', space=vmem, size = 0x800, scoped, tag = 'input window, operand 0, single buffered']
    #allocation3 [shape = 's32[1]{0}', space=sflag, size = 0x4, scoped, tag = 'scoped memory for tpu_custom_call.1']
    #allocation4 [shape = 's32[1]{0}', space=sflag, size = 0x4, scoped, tag = 'scoped memory for tpu_custom_call.1']
    #allocation5 [shape = 'u8[131072]{0}', space=vmem, size = 0x20000, scoped, tag = 'input window, operand 1, single buffered']
    #allocation6 [shape = 's32[1]{0}', space=sflag, size = 0x4, scoped, tag = 'scoped memory for tpu_custom_call.1']
    #allocation7 [shape = 'u8[2048]{0}', space=vmem, size = 0x800, scoped, tag = 'input window, operand 2, single buffered']
    #allocation8 [shape = 'u8[131072]{0}', space=vmem, size = 0x20000, scoped, tag = 'input window, operand 3, single buffered']
    #allocation9 [shape = 's32[1]{0}', space=sflag, size = 0x4, scoped, tag = 'scoped memory for tpu_custom_call.1']
    #allocation10 [shape = 'u8[2048]{0}', space=vmem, size = 0x800, scoped, tag = 'output window, operand 0, single buffered']
    %10 = vsyncpa [#allocation3], 0
    %11 = vsyncpa [#allocation6], 0
    %12 = vsyncpa [#allocation9], 0
    %13 = vsyncpa [#allocation4], 0
    // Predicated region
    $region2: #{tpu_custom_call.1} parent=1 // pred_check
      _
    $region3: #{tpu_custom_call.1} parent=1 // pred_check_branch
      %15 = sbr.rel (0) target = $region5
    $region4: #{tpu_custom_call.1} parent=1 // pred_region
      %s17 = ssub.s32 64, 64
      %18 = vsyncadd [#allocation3], %s17
      %s20 = sshll.u32 [#allocation2], 4
      %s21 = int_to_ptr.vmem [resolvable:$true] %s20
      %23 = dma.hbm_to_vmem [thread:$0]  %s0, 64, %s21, [#allocation3]
    $region5: #{tpu_custom_call.1} parent=1 // pred_fallthru
      _
    // Predicated region
    $region6: #{tpu_custom_call.1} parent=1 // pred_check
      _
    $region7: #{tpu_custom_call.1} parent=1 // pred_check_branch
      %25 = sbr.rel (0) target = $region9
    $region8: #{tpu_custom_call.1} parent=1 // pred_region
      %s27 = ssub.s32 4096, 4096
      %28 = vsyncadd [#allocation6], %s27
      %s29 = sshll.u32 [#allocation5], 4
      %s30 = int_to_ptr.vmem [resolvable:$true] %s29
      %35 = dma.hbm_to_vmem [thread:$0]  %s1, 4096, %s30, [#allocation6], 256, 256, 16
    $region9: #{tpu_custom_call.1} parent=1 // pred_fallthru
      _
    // Predicated region
    $region10: #{tpu_custom_call.1} parent=1 // pred_check
      _
    $region11: #{tpu_custom_call.1} parent=1 // pred_check_branch
      %37 = sbr.rel (0) target = $region13
    $region12: #{tpu_custom_call.1} parent=1 // pred_region
      %s39 = ssub.s32 64, 64
      %40 = vsyncadd [#allocation6], %s39
      %s42 = sshll.u32 [#allocation7], 4
      %s43 = int_to_ptr.vmem [resolvable:$true] %s42
      %45 = dma.hbm_to_vmem [thread:$0]  %s2, 64, %s43, [#allocation6]
    $region13: #{tpu_custom_call.1} parent=1 // pred_fallthru
      _
    // Predicated region
    $region14: #{tpu_custom_call.1} parent=1 // pred_check
      _
    $region15: #{tpu_custom_call.1} parent=1 // pred_check_branch
      %47 = sbr.rel (0) target = $region17
    $region16: #{tpu_custom_call.1} parent=1 // pred_region
      %s49 = ssub.s32 4096, 4096
      %50 = vsyncadd [#allocation9], %s49
      %s51 = sshll.u32 [#allocation8], 4
      %s52 = int_to_ptr.vmem [resolvable:$true] %s51
      %57 = dma.hbm_to_vmem [thread:$0]  %s3, 4096, %s52, [#allocation9], 64, 64, 4
    $region17: #{tpu_custom_call.1} parent=1 // pred_fallthru
      _
    // Predicated region
    $region18: #{tpu_custom_call.1} parent=1 // pred_check
      _
    $region19: #{tpu_custom_call.1} parent=1 // pred_check_branch
      %59 = sbr.rel (0) target = $region21
    $region20: #{tpu_custom_call.1} parent=1 // pred_region
      _
    $region21: #{tpu_custom_call.1} parent=1 // pred_fallthru
      _
    // Predicated region
    $region22: #{tpu_custom_call.1} parent=1 // pred_check
      _
    $region23: #{tpu_custom_call.1} parent=1 // pred_check_branch
      %61 = sbr.rel (0) target = $region25
    $region24: #{tpu_custom_call.1} parent=1 // pred_region
      %62 = dma.done [#allocation3], 64
    $region25: #{tpu_custom_call.1} parent=1 // pred_fallthru
      _
    // Predicated region
    $region26: #{tpu_custom_call.1} parent=1 // pred_check
      _
    $region27: #{tpu_custom_call.1} parent=1 // pred_check_branch
      %64 = sbr.rel (0) target = $region29
    $region28: #{tpu_custom_call.1} parent=1 // pred_region
      %65 = dma.done [#allocation6], 4096
    $region29: #{tpu_custom_call.1} parent=1 // pred_fallthru
      _
    // Predicated region
    $region30: #{tpu_custom_call.1} parent=1 // pred_check
      _
    $region31: #{tpu_custom_call.1} parent=1 // pred_check_branch
      %67 = sbr.rel (0) target = $region33
    $region32: #{tpu_custom_call.1} parent=1 // pred_region
      %68 = dma.done [#allocation6], 64
    $region33: #{tpu_custom_call.1} parent=1 // pred_fallthru
      _
    // Predicated region
    $region34: #{tpu_custom_call.1} parent=1 // pred_check
      _
    $region35: #{tpu_custom_call.1} parent=1 // pred_check_branch
      %70 = sbr.rel (0) target = $region37
    $region36: #{tpu_custom_call.1} parent=1 // pred_region
      %71 = dma.done [#allocation9], 4096
    $region37: #{tpu_custom_call.1} parent=1 // pred_fallthru
      _
    %v73 = vld [vmem:[#allocation2] sm:$0xf]
    %v74 = vpack.c.bf16 %v73, %v73
    %v75 = vld [vmem:[#allocation5] sm:$0xff]
    %v76 = vld [vmem:[#allocation5 + $0x8] sm:$0xff]
    %v77 = vld [vmem:[#allocation5 + $0x10] sm:$0xff]
    %v78 = vld [vmem:[#allocation5 + $0x18] sm:$0xff]
    %v79 = vld [vmem:[#allocation5 + $0x20] sm:$0xff]
    %v80 = vld [vmem:[#allocation5 + $0x28] sm:$0xff]
    %v81 = vld [vmem:[#allocation5 + $0x30] sm:$0xff]
    %v82 = vld [vmem:[#allocation5 + $0x38] sm:$0xff]
    %v83 = vld [vmem:[#allocation5 + $0x40] sm:$0xff]
    %v84 = vld [vmem:[#allocation5 + $0x48] sm:$0xff]
    %v85 = vld [vmem:[#allocation5 + $0x50] sm:$0xff]
    %v86 = vld [vmem:[#allocation5 + $0x58] sm:$0xff]
    %v87 = vld [vmem:[#allocation5 + $0x60] sm:$0xff]
    %v88 = vld [vmem:[#allocation5 + $0x68] sm:$0xff]
    %v89 = vld [vmem:[#allocation5 + $0x70] sm:$0xff]
    %v90 = vld [vmem:[#allocation5 + $0x78] sm:$0xff]
    %v91 = vld [vmem:[#allocation5 + $0x80] sm:$0xff]
    %v92 = vld [vmem:[#allocation5 + $0x88] sm:$0xff]
    %v93 = vld [vmem:[#allocation5 + $0x90] sm:$0xff]
    %v94 = vld [vmem:[#allocation5 + $0x98] sm:$0xff]
    %v95 = vld [vmem:[#allocation5 + $0xa0] sm:$0xff]
    %v96 = vld [vmem:[#allocation5 + $0xa8] sm:$0xff]
    %v97 = vld [vmem:[#allocation5 + $0xb0] sm:$0xff]
    %v98 = vld [vmem:[#allocation5 + $0xb8] sm:$0xff]
    %v99 = vld [vmem:[#allocation5 + $0xc0] sm:$0xff]
    %v100 = vld [vmem:[#allocation5 + $0xc8] sm:$0xff]
    %v101 = vld [vmem:[#allocation5 + $0xd0] sm:$0xff]
    %v102 = vld [vmem:[#allocation5 + $0xd8] sm:$0xff]
    %v103 = vld [vmem:[#allocation5 + $0xe0] sm:$0xff]
    %v104 = vld [vmem:[#allocation5 + $0xe8] sm:$0xff]
    %v105 = vld [vmem:[#allocation5 + $0xf0] sm:$0xff]
    %v106 = vld [vmem:[#allocation5 + $0xf8] sm:$0xff]
    %v107 = vld [vmem:[#allocation7] sm:$0xf]
    %v109 = vlaneseq
    %v110 = vshrl.u32 %v109, 7
    %v111 = vsub.s32 0, %v110
    %v112 = vrot.slane %v107, %v111
    %v113 = vlaneseq
    %v114 = vshrl.u32 %v113, 7
    %v115 = vsub.s32 1, %v114
    %v116 = vrot.slane %v107, %v115
    %v117 = vlaneseq
    %v118 = vshrl.u32 %v117, 7
    %v119 = vsub.s32 2, %v118
    %v120 = vrot.slane %v107, %v119
    %v121 = vlaneseq
    %v122 = vshrl.u32 %v121, 7
    %v123 = vsub.s32 3, %v122
    %v124 = vrot.slane %v107, %v123
    %v161 = vunpack.c.l.b16 %v75
    %v162 = vunpack.c.h.b16 %v75
    %v163 = vunpack.c.l.b16 %v76
    %v164 = vunpack.c.h.b16 %v76
    %v165 = vunpack.c.l.b16 %v77
    %v166 = vunpack.c.h.b16 %v77
    %v167 = vunpack.c.l.b16 %v78
    %v168 = vunpack.c.h.b16 %v78
    %v169 = vunpack.c.l.b16 %v79
    %v170 = vunpack.c.h.b16 %v79
    %v171 = vunpack.c.l.b16 %v80
    %v172 = vunpack.c.h.b16 %v80
    %v173 = vunpack.c.l.b16 %v81
    %v174 = vunpack.c.h.b16 %v81
    %v175 = vunpack.c.l.b16 %v82
    %v176 = vunpack.c.h.b16 %v82
    %v177 = vunpack.c.l.b16 %v83
    %v178 = vunpack.c.h.b16 %v83
    %v179 = vunpack.c.l.b16 %v84
    %v180 = vunpack.c.h.b16 %v84
    %v181 = vunpack.c.l.b16 %v85
    %v182 = vunpack.c.h.b16 %v85
    %v183 = vunpack.c.l.b16 %v86
    %v184 = vunpack.c.h.b16 %v86
    %v185 = vunpack.c.l.b16 %v87
    %v186 = vunpack.c.h.b16 %v87
    %v187 = vunpack.c.l.b16 %v88
    %v188 = vunpack.c.h.b16 %v88
    %v189 = vunpack.c.l.b16 %v89
    %v190 = vunpack.c.h.b16 %v89
    %v191 = vunpack.c.l.b16 %v90
    %v192 = vunpack.c.h.b16 %v90
    %v193 = vunpack.c.l.b16 %v91
    %v194 = vunpack.c.h.b16 %v91
    %v195 = vunpack.c.l.b16 %v92
    %v196 = vunpack.c.h.b16 %v92
    %v197 = vunpack.c.l.b16 %v93
    %v198 = vunpack.c.h.b16 %v93
    %v199 = vunpack.c.l.b16 %v94
    %v200 = vunpack.c.h.b16 %v94
    %v201 = vunpack.c.l.b16 %v95
    %v202 = vunpack.c.h.b16 %v95
    %v203 = vunpack.c.l.b16 %v96
    %v204 = vunpack.c.h.b16 %v96
    %v205 = vunpack.c.l.b16 %v97
    %v206 = vunpack.c.h.b16 %v97
    %v207 = vunpack.c.l.b16 %v98
    %v208 = vunpack.c.h.b16 %v98
    %v209 = vunpack.c.l.b16 %v99
    %v210 = vunpack.c.h.b16 %v99
    %v211 = vunpack.c.l.b16 %v100
    %v212 = vunpack.c.h.b16 %v100
    %v213 = vunpack.c.l.b16 %v101
    %v214 = vunpack.c.h.b16 %v101
    %v215 = vunpack.c.l.b16 %v102
    %v216 = vunpack.c.h.b16 %v102
    %v217 = vunpack.c.l.b16 %v103
    %v218 = vunpack.c.h.b16 %v103
    %v219 = vunpack.c.l.b16 %v104
    %v220 = vunpack.c.h.b16 %v104
    %v221 = vunpack.c.l.b16 %v105
    %v222 = vunpack.c.h.b16 %v105
    %v223 = vunpack.c.l.b16 %v106
    %v224 = vunpack.c.h.b16 %v106
    %v225 = vpack.c.b16 %v165, %v161
    %v226 = vpack.c.b16 %v166, %v162
    %v227 = vpack.c.b16 %v167, %v163
    %v228 = vpack.c.b16 %v168, %v164
    %v229 = vpack.c.b16 %v173, %v169
    %v230 = vpack.c.b16 %v174, %v170
    %v231 = vpack.c.b16 %v175, %v171
    %v232 = vpack.c.b16 %v176, %v172
    %v233 = vpack.c.b16 %v181, %v177
    %v234 = vpack.c.b16 %v182, %v178
    %v235 = vpack.c.b16 %v183, %v179
    %v236 = vpack.c.b16 %v184, %v180
    %v237 = vpack.c.b16 %v189, %v185
    %v238 = vpack.c.b16 %v190, %v186
    %v239 = vpack.c.b16 %v191, %v187
    %v240 = vpack.c.b16 %v192, %v188
    %v241 = vpack.c.b16 %v197, %v193
    %v242 = vpack.c.b16 %v198, %v194
    %v243 = vpack.c.b16 %v199, %v195
    %v244 = vpack.c.b16 %v200, %v196
    %v245 = vpack.c.b16 %v205, %v201
    %v246 = vpack.c.b16 %v206, %v202
    %v247 = vpack.c.b16 %v207, %v203
    %v248 = vpack.c.b16 %v208, %v204
    %v249 = vpack.c.b16 %v213, %v209
    %v250 = vpack.c.b16 %v214, %v210
    %v251 = vpack.c.b16 %v215, %v211
    %v252 = vpack.c.b16 %v216, %v212
    %v253 = vpack.c.b16 %v221, %v217
    %v254 = vpack.c.b16 %v222, %v218
    %v255 = vpack.c.b16 %v223, %v219
    %v256 = vpack.c.b16 %v224, %v220
    %289 = vmatprep.subr.bf16.mxu0 %v254
    %290 = vmatpush1.bf16.msra.mxu0 %v253
    %291 = vmatprep.subr.bf16.mxu0 %v250
    %292 = vmatpush1.bf16.msra.mxu0 %v249
    %293 = vmatprep.subr.bf16.mxu0 %v246
    %294 = vmatpush1.bf16.msra.mxu0 %v245
    %295 = vmatprep.subr.bf16.mxu0 %v242
    %296 = vmatpush1.bf16.msra.mxu0 %v241
    %297 = vmatprep.subr.bf16.mxu0 %v238
    %298 = vmatpush1.bf16.msra.mxu0 %v237
    %299 = vmatprep.subr.bf16.mxu0 %v234
    %300 = vmatpush1.bf16.msra.mxu0 %v233
    %301 = vmatprep.subr.bf16.mxu0 %v230
    %302 = vmatpush1.bf16.msra.mxu0 %v229
    %303 = vmatprep.subr.bf16.mxu0 %v226
    %304 = vmatpush1.bf16.msra.mxu0 %v225
    %305 = vmatprep.subr.bf16.mxu0 0
    %306 = vmatpush2.bf16.msra.mxu0 0
    %307 = vmatprep.subr.bf16.mxu0 0
    %308 = vmatpush2.bf16.msra.mxu0 0
    %309 = vmatprep.subr.bf16.mxu0 0
    %310 = vmatpush2.bf16.msra.mxu0 0
    %311 = vmatprep.subr.bf16.mxu0 0
    %312 = vmatpush2.bf16.msra.mxu0 0
    %313 = vmatprep.subr.bf16.mxu0 0
    %314 = vmatpush2.bf16.msra.mxu0 0
    %315 = vmatprep.subr.bf16.mxu0 0
    %316 = vmatpush2.bf16.msra.mxu0 0
    %317 = vmatprep.subr.bf16.mxu0 0
    %318 = vmatpush2.bf16.msra.mxu0 0
    %319 = vmatprep.subr.bf16.mxu0 0
    %320 = vmatpush2.bf16.msra.mxu0 0
    %321 = vmatprep.mubr.bf16.mxu0 0
    %322 = vmatmul.mubr.bf16.gmra.mxu0 %v74
    %v323 = vpop.f32.mrf.mxu0
    %v324 = vadd.f32 %v112, %v323
    %v325 = vpop.f32.mrf.mxu0
    %v326 = vadd.f32 %v116, %v325
    %v327 = vpop.f32.mrf.mxu0
    %v328 = vpop.f32.mrf.mxu0
    %329 = vdwg.mxu0
    %330 = vmatprep.subr.bf16.mxu0 %v256
    %331 = vmatpush1.bf16.msra.mxu0 %v255
    %332 = vmatprep.subr.bf16.mxu0 %v252
    %333 = vmatpush1.bf16.msra.mxu0 %v251
    %334 = vmatprep.subr.bf16.mxu0 %v248
    %335 = vmatpush1.bf16.msra.mxu0 %v247
    %336 = vmatprep.subr.bf16.mxu0 %v244
    %337 = vmatpush1.bf16.msra.mxu0 %v243
    %338 = vmatprep.subr.bf16.mxu0 %v240
    %339 = vmatpush1.bf16.msra.mxu0 %v239
    %340 = vmatprep.subr.bf16.mxu0 %v236
    %341 = vmatpush1.bf16.msra.mxu0 %v235
    %342 = vmatprep.subr.bf16.mxu0 %v232
    %343 = vmatpush1.bf16.msra.mxu0 %v231
    %344 = vmatprep.subr.bf16.mxu0 %v228
    %345 = vmatpush1.bf16.msra.mxu0 %v227
    %346 = vmatprep.subr.bf16.mxu0 0
    %347 = vmatpush2.bf16.msra.mxu0 0
    %348 = vmatprep.subr.bf16.mxu0 0
    %349 = vmatpush2.bf16.msra.mxu0 0
    %350 = vmatprep.subr.bf16.mxu0 0
    %351 = vmatpush2.bf16.msra.mxu0 0
    %352 = vmatprep.subr.bf16.mxu0 0
    %353 = vmatpush2.bf16.msra.mxu0 0
    %354 = vmatprep.subr.bf16.mxu0 0
    %355 = vmatpush2.bf16.msra.mxu0 0
    %356 = vmatprep.subr.bf16.mxu0 0
    %357 = vmatpush2.bf16.msra.mxu0 0
    %358 = vmatprep.subr.bf16.mxu0 0
    %359 = vmatpush2.bf16.msra.mxu0 0
    %360 = vmatprep.subr.bf16.mxu0 0
    %361 = vmatpush2.bf16.msra.mxu0 0
    %362 = vmatprep.mubr.bf16.mxu0 0
    %363 = vmatmul.mubr.bf16.gmra.mxu0 %v74
    %v364 = vpop.f32.mrf.mxu0
    %v365 = vadd.f32 %v120, %v364
    %v366 = vpop.f32.mrf.mxu0
    %v367 = vadd.f32 %v124, %v366
    %v368 = vpop.f32.mrf.mxu0
    %v369 = vpop.f32.mrf.mxu0
    %370 = vdwg.mxu0
    %v371 = vmax.f32 %v324, 0.0
    %v372 = vmax.f32 %v326, 0.0
    %v373 = vmax.f32 %v365, 0.0
    %v374 = vmax.f32 %v367, 0.0
    %v375 = vpack.c.bf16 %v371, %v371
    %v376 = vpack.c.bf16 %v372, %v372
    %v377 = vpack.c.bf16 %v373, %v373
    %v378 = vpack.c.bf16 %v374, %v374
    %v379 = vld [vmem:[#allocation8] sm:$0xf]
    %v380 = vld [vmem:[#allocation8 + $0x4] sm:$0xf]
    %v381 = vld [vmem:[#allocation8 + $0x8] sm:$0xf]
    %v382 = vld [vmem:[#allocation8 + $0xc] sm:$0xf]
    %v383 = vld [vmem:[#allocation8 + $0x10] sm:$0xf]
    %v384 = vld [vmem:[#allocation8 + $0x14] sm:$0xf]
    %v385 = vld [vmem:[#allocation8 + $0x18] sm:$0xf]
    %v386 = vld [vmem:[#allocation8 + $0x1c] sm:$0xf]
    %v387 = vld [vmem:[#allocation8 + $0x20] sm:$0xf]
    %v388 = vld [vmem:[#allocation8 + $0x24] sm:$0xf]
    %v389 = vld [vmem:[#allocation8 + $0x28] sm:$0xf]
    %v390 = vld [vmem:[#allocation8 + $0x2c] sm:$0xf]
    %v391 = vld [vmem:[#allocation8 + $0x30] sm:$0xf]
    %v392 = vld [vmem:[#allocation8 + $0x34] sm:$0xf]
    %v393 = vld [vmem:[#allocation8 + $0x38] sm:$0xf]
    %v394 = vld [vmem:[#allocation8 + $0x3c] sm:$0xf]
    %v395 = vld [vmem:[#allocation8 + $0x40] sm:$0xf]
    %v396 = vld [vmem:[#allocation8 + $0x44] sm:$0xf]
    %v397 = vld [vmem:[#allocation8 + $0x48] sm:$0xf]
    %v398 = vld [vmem:[#allocation8 + $0x4c] sm:$0xf]
    %v399 = vld [vmem:[#allocation8 + $0x50] sm:$0xf]
    %v400 = vld [vmem:[#allocation8 + $0x54] sm:$0xf]
    %v401 = vld [vmem:[#allocation8 + $0x58] sm:$0xf]
    %v402 = vld [vmem:[#allocation8 + $0x5c] sm:$0xf]
    %v403 = vld [vmem:[#allocation8 + $0x60] sm:$0xf]
    %v404 = vld [vmem:[#allocation8 + $0x64] sm:$0xf]
    %v405 = vld [vmem:[#allocation8 + $0x68] sm:$0xf]
    %v406 = vld [vmem:[#allocation8 + $0x6c] sm:$0xf]
    %v407 = vld [vmem:[#allocation8 + $0x70] sm:$0xf]
    %v408 = vld [vmem:[#allocation8 + $0x74] sm:$0xf]
    %v409 = vld [vmem:[#allocation8 + $0x78] sm:$0xf]
    %v410 = vld [vmem:[#allocation8 + $0x7c] sm:$0xf]
    %v411 = vld [vmem:[#allocation8 + $0x80] sm:$0xf]
    %v412 = vld [vmem:[#allocation8 + $0x84] sm:$0xf]
    %v413 = vld [vmem:[#allocation8 + $0x88] sm:$0xf]
    %v414 = vld [vmem:[#allocation8 + $0x8c] sm:$0xf]
    %v415 = vld [vmem:[#allocation8 + $0x90] sm:$0xf]
    %v416 = vld [vmem:[#allocation8 + $0x94] sm:$0xf]
    %v417 = vld [vmem:[#allocation8 + $0x98] sm:$0xf]
    %v418 = vld [vmem:[#allocation8 + $0x9c] sm:$0xf]
    %v419 = vld [vmem:[#allocation8 + $0xa0] sm:$0xf]
    %v420 = vld [vmem:[#allocation8 + $0xa4] sm:$0xf]
    %v421 = vld [vmem:[#allocation8 + $0xa8] sm:$0xf]
    %v422 = vld [vmem:[#allocation8 + $0xac] sm:$0xf]
    %v423 = vld [vmem:[#allocation8 + $0xb0] sm:$0xf]
    %v424 = vld [vmem:[#allocation8 + $0xb4] sm:$0xf]
    %v425 = vld [vmem:[#allocation8 + $0xb8] sm:$0xf]
    %v426 = vld [vmem:[#allocation8 + $0xbc] sm:$0xf]
    %v427 = vld [vmem:[#allocation8 + $0xc0] sm:$0xf]
    %v428 = vld [vmem:[#allocation8 + $0xc4] sm:$0xf]
    %v429 = vld [vmem:[#allocation8 + $0xc8] sm:$0xf]
    %v430 = vld [vmem:[#allocation8 + $0xcc] sm:$0xf]
    %v431 = vld [vmem:[#allocation8 + $0xd0] sm:$0xf]
    %v432 = vld [vmem:[#allocation8 + $0xd4] sm:$0xf]
    %v433 = vld [vmem:[#allocation8 + $0xd8] sm:$0xf]
    %v434 = vld [vmem:[#allocation8 + $0xdc] sm:$0xf]
    %v435 = vld [vmem:[#allocation8 + $0xe0] sm:$0xf]
    %v436 = vld [vmem:[#allocation8 + $0xe4] sm:$0xf]
    %v437 = vld [vmem:[#allocation8 + $0xe8] sm:$0xf]
    %v438 = vld [vmem:[#allocation8 + $0xec] sm:$0xf]
    %v439 = vld [vmem:[#allocation8 + $0xf0] sm:$0xf]
    %v440 = vld [vmem:[#allocation8 + $0xf4] sm:$0xf]
    %v441 = vld [vmem:[#allocation8 + $0xf8] sm:$0xf]
    %v442 = vld [vmem:[#allocation8 + $0xfc] sm:$0xf]
    %v443 = vld [vmem:[%s4] sm:$0x1]
    %v445 = vlaneseq
    %v446 = vshrl.u32 %v445, 7
    %v447 = vsub.s32 0, %v446
    %v448 = vrot.slane %v443, %v447
    %v514 = vunpack.c.l.b16 %v379
    %v515 = vunpack.c.l.b16 %v380
    %v516 = vunpack.c.l.b16 %v381
    %v517 = vunpack.c.l.b16 %v382
    %v518 = vunpack.c.l.b16 %v383
    %v519 = vunpack.c.l.b16 %v384
    %v520 = vunpack.c.l.b16 %v385
    %v521 = vunpack.c.l.b16 %v386
    %v522 = vunpack.c.l.b16 %v387
    %v523 = vunpack.c.l.b16 %v388
    %v524 = vunpack.c.l.b16 %v389
    %v525 = vunpack.c.l.b16 %v390
    %v526 = vunpack.c.l.b16 %v391
    %v527 = vunpack.c.l.b16 %v392
    %v528 = vunpack.c.l.b16 %v393
    %v529 = vunpack.c.l.b16 %v394
    %v530 = vunpack.c.l.b16 %v395
    %v531 = vunpack.c.l.b16 %v396
    %v532 = vunpack.c.l.b16 %v397
    %v533 = vunpack.c.l.b16 %v398
    %v534 = vunpack.c.l.b16 %v399
    %v535 = vunpack.c.l.b16 %v400
    %v536 = vunpack.c.l.b16 %v401
    %v537 = vunpack.c.l.b16 %v402
    %v538 = vunpack.c.l.b16 %v403
    %v539 = vunpack.c.l.b16 %v404
    %v540 = vunpack.c.l.b16 %v405
    %v541 = vunpack.c.l.b16 %v406
    %v542 = vunpack.c.l.b16 %v407
    %v543 = vunpack.c.l.b16 %v408
    %v544 = vunpack.c.l.b16 %v409
    %v545 = vunpack.c.l.b16 %v410
    %v546 = vunpack.c.l.b16 %v411
    %v547 = vunpack.c.l.b16 %v412
    %v548 = vunpack.c.l.b16 %v413
    %v549 = vunpack.c.l.b16 %v414
    %v550 = vunpack.c.l.b16 %v415
    %v551 = vunpack.c.l.b16 %v416
    %v552 = vunpack.c.l.b16 %v417
    %v553 = vunpack.c.l.b16 %v418
    %v554 = vunpack.c.l.b16 %v419
    %v555 = vunpack.c.l.b16 %v420
    %v556 = vunpack.c.l.b16 %v421
    %v557 = vunpack.c.l.b16 %v422
    %v558 = vunpack.c.l.b16 %v423
    %v559 = vunpack.c.l.b16 %v424
    %v560 = vunpack.c.l.b16 %v425
    %v561 = vunpack.c.l.b16 %v426
    %v562 = vunpack.c.l.b16 %v427
    %v563 = vunpack.c.l.b16 %v428
    %v564 = vunpack.c.l.b16 %v429
    %v565 = vunpack.c.l.b16 %v430
    %v566 = vunpack.c.l.b16 %v431
    %v567 = vunpack.c.l.b16 %v432
    %v568 = vunpack.c.l.b16 %v433
    %v569 = vunpack.c.l.b16 %v434
    %v570 = vunpack.c.l.b16 %v435
    %v571 = vunpack.c.l.b16 %v436
    %v572 = vunpack.c.l.b16 %v437
    %v573 = vunpack.c.l.b16 %v438
    %v574 = vunpack.c.l.b16 %v439
    %v575 = vunpack.c.l.b16 %v440
    %v576 = vunpack.c.l.b16 %v441
    %v577 = vunpack.c.l.b16 %v442
    %v578 = vpack.c.b16 %v515, %v514
    %v579 = vpack.c.b16 %v517, %v516
    %v580 = vpack.c.b16 %v519, %v518
    %v581 = vpack.c.b16 %v521, %v520
    %v582 = vpack.c.b16 %v523, %v522
    %v583 = vpack.c.b16 %v525, %v524
    %v584 = vpack.c.b16 %v527, %v526
    %v585 = vpack.c.b16 %v529, %v528
    %v586 = vpack.c.b16 %v531, %v530
    %v587 = vpack.c.b16 %v533, %v532
    %v588 = vpack.c.b16 %v535, %v534
    %v589 = vpack.c.b16 %v537, %v536
    %v590 = vpack.c.b16 %v539, %v538
    %v591 = vpack.c.b16 %v541, %v540
    %v592 = vpack.c.b16 %v543, %v542
    %v593 = vpack.c.b16 %v545, %v544
    %v594 = vpack.c.b16 %v547, %v546
    %v595 = vpack.c.b16 %v549, %v548
    %v596 = vpack.c.b16 %v551, %v550
    %v597 = vpack.c.b16 %v553, %v552
    %v598 = vpack.c.b16 %v555, %v554
    %v599 = vpack.c.b16 %v557, %v556
    %v600 = vpack.c.b16 %v559, %v558
    %v601 = vpack.c.b16 %v561, %v560
    %v602 = vpack.c.b16 %v563, %v562
    %v603 = vpack.c.b16 %v565, %v564
    %v604 = vpack.c.b16 %v567, %v566
    %v605 = vpack.c.b16 %v569, %v568
    %v606 = vpack.c.b16 %v571, %v570
    %v607 = vpack.c.b16 %v573, %v572
    %v608 = vpack.c.b16 %v575, %v574
    %v609 = vpack.c.b16 %v577, %v576
    %642 = vmatprep.subr.bf16.mxu0 0
    %643 = vmatpush1.bf16.msra.mxu0 %v585
    %644 = vmatprep.subr.bf16.mxu0 0
    %645 = vmatpush1.bf16.msra.mxu0 %v584
    %646 = vmatprep.subr.bf16.mxu0 0
    %647 = vmatpush1.bf16.msra.mxu0 %v583
    %648 = vmatprep.subr.bf16.mxu0 0
    %649 = vmatpush1.bf16.msra.mxu0 %v582
    %650 = vmatprep.subr.bf16.mxu0 0
    %651 = vmatpush1.bf16.msra.mxu0 %v581
    %652 = vmatprep.subr.bf16.mxu0 0
    %653 = vmatpush1.bf16.msra.mxu0 %v580
    %654 = vmatprep.subr.bf16.mxu0 0
    %655 = vmatpush1.bf16.msra.mxu0 %v579
    %656 = vmatprep.subr.bf16.mxu0 0
    %657 = vmatpush1.bf16.msra.mxu0 %v578
    %658 = vmatprep.subr.bf16.mxu0 0
    %659 = vmatpush2.bf16.msra.mxu0 %v593
    %660 = vmatprep.subr.bf16.mxu0 0
    %661 = vmatpush2.bf16.msra.mxu0 %v592
    %662 = vmatprep.subr.bf16.mxu0 0
    %663 = vmatpush2.bf16.msra.mxu0 %v591
    %664 = vmatprep.subr.bf16.mxu0 0
    %665 = vmatpush2.bf16.msra.mxu0 %v590
    %666 = vmatprep.subr.bf16.mxu0 0
    %667 = vmatpush2.bf16.msra.mxu0 %v589
    %668 = vmatprep.subr.bf16.mxu0 0
    %669 = vmatpush2.bf16.msra.mxu0 %v588
    %670 = vmatprep.subr.bf16.mxu0 0
    %671 = vmatpush2.bf16.msra.mxu0 %v587
    %672 = vmatprep.subr.bf16.mxu0 0
    %673 = vmatpush2.bf16.msra.mxu0 %v586
    %674 = vmatprep.mubr.bf16.mxu0 %v376
    %675 = vmatmul.mubr.bf16.gmra.mxu0 %v375
    %v676 = vpop.f32.mrf.mxu0
    %v677 = vadd.f32 %v448, %v676
    %v678 = vpop.f32.mrf.mxu0
    %v679 = vpop.f32.mrf.mxu0
    %v680 = vpop.f32.mrf.mxu0
    %681 = vdwg.mxu0
    %682 = vmatprep.subr.bf16.mxu0 0
    %683 = vmatpush1.bf16.msra.mxu0 %v601
    %684 = vmatprep.subr.bf16.mxu0 0
    %685 = vmatpush1.bf16.msra.mxu0 %v600
    %686 = vmatprep.subr.bf16.mxu0 0
    %687 = vmatpush1.bf16.msra.mxu0 %v599
    %688 = vmatprep.subr.bf16.mxu0 0
    %689 = vmatpush1.bf16.msra.mxu0 %v598
    %690 = vmatprep.subr.bf16.mxu0 0
    %691 = vmatpush1.bf16.msra.mxu0 %v597
    %692 = vmatprep.subr.bf16.mxu0 0
    %693 = vmatpush1.bf16.msra.mxu0 %v596
    %694 = vmatprep.subr.bf16.mxu0 0
    %695 = vmatpush1.bf16.msra.mxu0 %v595
    %696 = vmatprep.subr.bf16.mxu0 0
    %697 = vmatpush1.bf16.msra.mxu0 %v594
    %698 = vmatprep.subr.bf16.mxu0 0
    %699 = vmatpush2.bf16.msra.mxu0 %v609
    %700 = vmatprep.subr.bf16.mxu0 0
    %701 = vmatpush2.bf16.msra.mxu0 %v608
    %702 = vmatprep.subr.bf16.mxu0 0
    %703 = vmatpush2.bf16.msra.mxu0 %v607
    %704 = vmatprep.subr.bf16.mxu0 0
    %705 = vmatpush2.bf16.msra.mxu0 %v606
    %706 = vmatprep.subr.bf16.mxu0 0
    %707 = vmatpush2.bf16.msra.mxu0 %v605
    %708 = vmatprep.subr.bf16.mxu0 0
    %709 = vmatpush2.bf16.msra.mxu0 %v604
    %710 = vmatprep.subr.bf16.mxu0 0
    %711 = vmatpush2.bf16.msra.mxu0 %v603
    %712 = vmatprep.subr.bf16.mxu0 0
    %713 = vmatpush2.bf16.msra.mxu0 %v602
    %714 = vmatprep.mubr.bf16.mxu0 %v378
    %715 = vmatmul.mubr.bf16.gmra.mxu0 %v377
    %v716 = vpop.f32.mrf.mxu0
    %v717 = vadd.f32 %v677, %v716
    %v718 = vpop.f32.mrf.mxu0
    %v719 = vpop.f32.mrf.mxu0
    %v720 = vpop.f32.mrf.mxu0
    %721 = vdwg.mxu0
    %722 = vst [vmem:[#allocation10] sm:$0xf] %v717
    // Predicated region
    $region38: #{tpu_custom_call.1} parent=1 // pred_check
      _
    $region39: #{tpu_custom_call.1} parent=1 // pred_check_branch
      %724 = sbr.rel (0) target = $region41
    $region40: #{tpu_custom_call.1} parent=1 // pred_region
      %s726 = ssub.s32 64, 64
      %727 = vsyncadd [#allocation4], %s726
      %s729 = sshll.u32 [#allocation10], 4
      %s730 = int_to_ptr.vmem [resolvable:$true] %s729
      %732 = dma.vmem_to_hbm [thread:$0]  %s730, 64, %s5, [#allocation4]
    $region41: #{tpu_custom_call.1} parent=1 // pred_fallthru
      _
    // Predicated region
    $region42: #{tpu_custom_call.1} parent=1 // pred_check
      _
    $region43: #{tpu_custom_call.1} parent=1 // pred_check_branch
      %734 = sbr.rel (0) target = $region45
    $region44: #{tpu_custom_call.1} parent=1 // pred_region
      %735 = dma.done [#allocation4], 64
    $region45: #{tpu_custom_call.1} parent=1 // pred_fallthru
      _
    %736 = vsyncpa [#allocation3], 1
    %737 = vsyncpa [#allocation6], 1
    %738 = vsyncpa [#allocation9], 1
    %739 = vsyncpa [#allocation4], 1

</llo_original>
